<compile_context>
chip_gen: v5e
topology: v5e:2x2
jax: 0.10.0
libtpu: 0.0.40
codegen_flags: <defaults>
</compile_context>

<pallas_src>
import math

import jax
import jax.numpy as jnp
from jax import lax
from jax.experimental import pallas as pl
from jax.experimental.pallas import tpu as pltpu


def _round_up(n, m):
    return ((n + m - 1) // m) * m


def _contract(x_ref, w_ref):
    """f = x @ w  (2*pi already folded into w), f32 accumulation on the MXU."""
    return jnp.dot(
        x_ref[...],
        w_ref[...],
        preferred_element_type=jnp.float32,
        precision=lax.Precision.HIGHEST,
    )


def _fourier_kernel_fused(x_ref, w_ref, o_ref):
    # x_ref: [tile_b, K], w_ref: [K, half], o_ref: [tile_b, 2*half]
    # Used when half % 128 == 0 so both halves are unmasked lane-dense stores.
    half = w_ref.shape[-1]
    f = _contract(x_ref, w_ref)
    o_ref[:, :half] = jnp.cos(f).astype(o_ref.dtype)
    o_ref[:, half:] = jnp.sin(f).astype(o_ref.dtype)


def _fourier_kernel_split(x_ref, w_ref, o_ref):
    # o_ref: [tile_b, 2, half] -- cos into [:, 0, :], sin into [:, 1, :].
    # The wrapper reshapes [B, 2, half] -> [B, 2*half] (contiguous, no extra
    # HBM pass), replacing the previous two-output + jnp.concatenate scheme.
    f = _contract(x_ref, w_ref)
    o_ref[:, 0, :] = jnp.cos(f).astype(o_ref.dtype)
    o_ref[:, 1, :] = jnp.sin(f).astype(o_ref.dtype)


def _max_tile_rows(in_features, half, fused, x_itemsize, out_itemsize):
    """Largest batch tile (multiple of 8) whose double-buffered VMEM footprint
    stays under a budget that is safe on every chip's scoped-VMEM default
    (v5e 16 MiB, v6e/v7x 32 MiB; v7x physical VMEM is only 64 MiB)."""
    # x block is lane-padded to 128 lanes in VMEM (~512 B/row for f32), not K*4 B.
    x_row = _round_up(in_features, 128) * x_itemsize
    if fused:
        o_row = _round_up(2 * half, 128) * out_itemsize
    else:
        # [2, half] trailing slab tiles to (8, 128) in VMEM -> sublanes 2 -> 8.
        o_row = 8 * _round_up(half, 128) * out_itemsize
    per_row = 2 * (x_row + o_row)          # x2 for double buffering
    budget = 12 * 1024 * 1024              # comfortably under v5e's 16 MiB scoped default
    cap = max(8, (budget // per_row) // 8 * 8)
    return int(min(cap, 8192))


def fourier_features(x, weight, *, tile_b=None, out_dtype=None):
    """FourierFeatures forward.

    x:      [..., in_features]
    weight: [out_features // 2, in_features]   (PyTorch parameter layout)
    returns [..., out_features]  (cos half followed by sin half)

    out_dtype defaults to x.dtype; pass jnp.bfloat16 to halve output HBM
    traffic on bandwidth-limited chips (compute stays f32, cast at the store).
    """
    out_dtype = x.dtype if out_dtype is None else out_dtype
    *lead, in_features = x.shape
    half, in_f2 = weight.shape
    assert in_features == in_f2
    out_features = 2 * half

    # Flatten leading dims into one batch axis.
    B = 1
    for d in lead:
        B *= d
    x2 = x.reshape(B, in_features)

    # Fold 2*pi into the (tiny) pre-transposed weight: f = x @ (2*pi * W^T).
    # TODO(synk): in a real model, store the parameter pre-transposed/scaled once
    # at init instead of per call (it is a [K, half] constant).
    w_t = (2.0 * math.pi) * weight.T.astype(jnp.float32)  # [in_features, half]

    fused = (half % 128 == 0)
    cap = _max_tile_rows(in_features, half, fused,
                         jnp.dtype(x2.dtype).itemsize,
                         jnp.dtype(out_dtype).itemsize)
    if tile_b is not None:
        # User hint is still validated against the per-chip VMEM budget.
        cap = min(cap, max(8, _round_up(int(tile_b), 8)))

    # Pick a tile that avoids B_pad != B (and the resulting wrapper-side
    # out[:B] copy of the whole output) whenever possible.
    if B <= cap:
        tb, B_pad = B, B                       # single full-extent block, grid=(1,)
    else:
        tb = None
        t = (cap // 8) * 8
        lo = max(8, (cap // 2 // 8) * 8)       # keep tiles big (>= cap/2)
        while t >= lo:
            if B % t == 0:
                tb = t
                break
            t -= 8
        if tb is None:                         # fallback: pad + slice
            tb = (cap // 8) * 8
            B_pad = _round_up(B, tb)
        else:
            B_pad = B
    if B_pad != B:
        x2 = jnp.pad(x2, ((0, B_pad - B), (0, 0)))  # padded rows sliced off below
    grid = (B_pad // tb,)

    out_itemsize = jnp.dtype(out_dtype).itemsize
    cost = pl.CostEstimate(
        flops=2 * B_pad * half * in_features,
        transcendentals=2 * B_pad * half,
        bytes_accessed=(B_pad * in_features * x2.dtype.itemsize
                        + in_features * half * 4
                        + B_pad * out_features * out_itemsize),
    )
    # "parallel" lets the batch axis shard across TensorCores on megacore parts
    # (v7x); on single-TC chips it is a no-op.
    compiler_params = pltpu.CompilerParams(
        dimension_semantics=("parallel",),
    )

    x_spec = pl.BlockSpec((tb, in_features), lambda i: (i, 0))
    w_spec = pl.BlockSpec((in_features, half), lambda i: (0, 0))  # stays resident

    if fused:
        out2 = pl.pallas_call(
            _fourier_kernel_fused,
            out_shape=jax.ShapeDtypeStruct((B_pad, out_features), out_dtype),
            grid_spec=pltpu.PrefetchScalarGridSpec(
                num_scalar_prefetch=0,
                grid=grid,
                in_specs=[x_spec, w_spec],
                out_specs=pl.BlockSpec((tb, out_features), lambda i: (i, 0)),
            ),
            compiler_params=compiler_params,
            cost_estimate=cost,
        )(x2, w_t)
    else:
        out3 = pl.pallas_call(
            _fourier_kernel_split,
            out_shape=jax.ShapeDtypeStruct((B_pad, 2, half), out_dtype),
            grid_spec=pltpu.PrefetchScalarGridSpec(
                num_scalar_prefetch=0,
                grid=grid,
                in_specs=[x_spec, w_spec],
                out_specs=pl.BlockSpec((tb, 2, half), lambda i: (i, 0, 0)),
            ),
            compiler_params=compiler_params,
            cost_estimate=cost,
        )(x2, w_t)
        out2 = out3.reshape(B_pad, out_features)  # contiguous reshape, no concat

    if B_pad != B:
        out2 = out2[:B]
    return out2.reshape(*lead, out_features)


if __name__ == "__main__":
    key = jax.random.PRNGKey(0)
    k_x, k_w, k_x2, k_w2 = jax.random.split(key, 4)

    def ref_fourier(x, weight):
        f = 2.0 * math.pi * jnp.dot(x, weight.T, precision=lax.Precision.HIGHEST)
        return jnp.concatenate([jnp.cos(f), jnp.sin(f)], axis=-1)

    # Timestep-embedding-like shapes: in_features=4, out_features=256
    # (half=128 -> fused lane-dense output path).
    B, in_features, out_features = 8, 4, 256
    std = 1.0

    x = jax.random.normal(k_x, (B, in_features), dtype=jnp.float32)
    weight = jax.random.normal(
        k_w, (out_features // 2, in_features), dtype=jnp.float32) * std

    out = jax.block_until_ready(fourier_features(x, weight))
    ref = ref_fourier(x, weight)
    assert out.shape == (B, out_features)
    assert jnp.allclose(out, ref, atol=1e-4, rtol=1e-4)

    # Ragged batch (B not a multiple of 8): handled with a full-extent block,
    # so no padding and no out[:B] copy.
    B2 = 10
    x_ragged = jax.random.normal(k_x2, (B2, in_features), dtype=jnp.float32)
    out2 = jax.block_until_ready(fourier_features(x_ragged, weight))
    ref2 = ref_fourier(x_ragged, weight)
    assert out2.shape == (B2, out_features)
    assert jnp.allclose(out2, ref2, atol=1e-4, rtol=1e-4)

    # Split path: half % 128 != 0 (out_features=192 -> half=96); single 3-D
    # output reshaped in the wrapper (no concatenate).
    out_features3 = 192
    weight3 = jax.random.normal(
        k_w2, (out_features3 // 2, in_features), dtype=jnp.float32) * std
    out3 = jax.block_until_ready(fourier_features(x, weight3))
    ref3 = ref_fourier(x, weight3)
    assert out3.shape == (B, out_features3)
    assert jnp.allclose(out3, ref3, atol=1e-4, rtol=1e-4)

    print("KERNEL_OK")
</pallas_src>

<mosaic_0001>
module attributes {stable_mosaic.version = 11 : i64} {
  func.func @_fourier_kernel_fused(%arg0: i32, %arg1: memref<8x4xf32, #tpu.memory_space<vmem>>, %arg2: memref<4x128xf32, #tpu.memory_space<vmem>>, %arg3: memref<8x256xf32, #tpu.memory_space<vmem>>) attributes {dimension_semantics = [#tpu.dimension_semantics<parallel>], iteration_bounds = array<i64: 1>, scalar_prefetch = 0 : i64, scratch_operands = 0 : i64, tpu.core_type = #tpu.core_type<tc>, window_params = [{transform_indices = @transform_0, window_bounds = array<i64: 8, 4>}, {pipeline_mode = #tpu.pipeline_mode<synchronous>, transform_indices = @transform_1, window_bounds = array<i64: 4, 128>}, {transform_indices = @transform_2, window_bounds = array<i64: 8, 256>}]} {
    %c0 = arith.constant 0 : index
    %c0_0 = arith.constant 0 : index
    %0 = vector.load %arg1[%c0, %c0_0] : memref<8x4xf32, #tpu.memory_space<vmem>>, vector<8x4xf32>
    %c0_1 = arith.constant 0 : index
    %c0_2 = arith.constant 0 : index
    %1 = vector.load %arg2[%c0_1, %c0_2] : memref<4x128xf32, #tpu.memory_space<vmem>>, vector<4x128xf32>
    %cst = arith.constant dense<0.000000e+00> : vector<8x128xf32>
    %2 = tpu.matmul %0, %1, %cst {dimension_numbers = #tpu.dot_dimension_numbers<[1], [0], [0], [1], [0, 0, 1, 1], [], []>, precision = #tpu.contract_precision<fp32>} : vector<8x4xf32>, vector<4x128xf32>, vector<8x128xf32> -> vector<8x128xf32>
    %3 = math.cos %2 : vector<8x128xf32>
    %c0_3 = arith.constant 0 : index
    %c0_4 = arith.constant 0 : index
    %4 = vector.load %arg3[%c0_3, %c0_4] : memref<8x256xf32, #tpu.memory_space<vmem>>, vector<8x128xf32>
    tpu.vector_store %arg3[%c0_3, %c0_4], %3 {strides = array<i32>} : memref<8x256xf32, #tpu.memory_space<vmem>>, vector<8x128xf32>,
    %5 = math.sin %2 : vector<8x128xf32>
    %c0_5 = arith.constant 0 : index
    %c128 = arith.constant 128 : index
    %6 = vector.load %arg3[%c0_5, %c128] : memref<8x256xf32, #tpu.memory_space<vmem>>, vector<8x128xf32>
    tpu.vector_store %arg3[%c0_5, %c128], %5 {strides = array<i32>} : memref<8x256xf32, #tpu.memory_space<vmem>>, vector<8x128xf32>,
    return
  }
  func.func @transform_0(%arg0: i32) -> (i32, i32) {
    %c0_i32 = arith.constant 0 : i32
    %c0_i32_0 = arith.constant 0 : i32
    return %arg0, %c0_i32 : i32, i32
  }
  func.func @transform_1(%arg0: i32) -> (i32, i32) {
    %c0_i32 = arith.constant 0 : i32
    %c0_i32_0 = arith.constant 0 : i32
    %c0_i32_1 = arith.constant 0 : i32
    return %c0_i32, %c0_i32_0 : i32, i32
  }
  func.func @transform_2(%arg0: i32) -> (i32, i32) {
    %c0_i32 = arith.constant 0 : i32
    %c0_i32_0 = arith.constant 0 : i32
    return %arg0, %c0_i32 : i32, i32
  }
}

</mosaic_0001>

<llo_original>
// kernel: tpu_custom_call.1
$region0: #{tpu_custom_call.1}
  #allocation0 [shape = 'u32[]', space=smem, size = 0x4, offset = 0x4, fixed_abs, tag = 'smem constant byte address 0x4 - core index']
  #allocation1 [shape = 'u32[72,128]{1,0:T(1,128)}', space=vmem, size = 0x9000, scoped, tag = 'internal scratch']
  %s0 = inlined_call_operand.vmem [shape: f32[8,4], index: 0, kind: input, shape index: {}]
  %s1 = inlined_call_operand.vmem [shape: f32[4,128], index: 1, kind: input, shape index: {}]
  %s2 = inlined_call_operand.hbm [shape: f32[8,256], index: 2, kind: output, shape index: {}]
  %s3 = sld [smem:[#allocation0]]
  $region18: #{tpu_custom_call.1} parent=0
    _
  %s5 = ssub.s32 1, %s3
  %s6 = scalar_select 0, %s5, %s3
  $region1: #{tpu_custom_call.1} parent=0
    #allocation2 [shape = 'u8[8192]{0}', space=vmem, size = 0x2000, scoped, tag = 'output window, operand 0, single buffered']
    #allocation3 [shape = 's32[1]{0}', space=sflag, size = 0x4, scoped, tag = 'scoped memory for tpu_custom_call.1']
    %7 = vsyncpa [#allocation3], 0
    // Predicated region
    $region2: #{tpu_custom_call.1} parent=1 // pred_check
      _
    $region3: #{tpu_custom_call.1} parent=1 // pred_check_branch
      %9 = sbr.rel (0) target = $region5
    $region4: #{tpu_custom_call.1} parent=1 // pred_region
      _
    $region5: #{tpu_custom_call.1} parent=1 // pred_fallthru
      _
    // Predicated region
    $region6: #{tpu_custom_call.1} parent=1 // pred_check
      _
    $region7: #{tpu_custom_call.1} parent=1 // pred_check_branch
      %11 = sbr.rel (0) target = $region9
    $region8: #{tpu_custom_call.1} parent=1 // pred_region
      _
    $region9: #{tpu_custom_call.1} parent=1 // pred_fallthru
      _
    %v12 = vld [vmem:[%s0] sm:$0xff]
    %v13 = vld [vmem:[%s1] sm:$0xf]
    %vm14 = vcmask 31744
    %v16 = vsel %vm14, %v12, 0
    %vm18 = vcmask 1043456
    %v20 = vsel %vm18, %v13, 0
    %22 = vmatpush.msra.mxu0 0.0
    %23 = vmatpush.msra.mxu0 0.0
    %24 = vmatpush.msra.mxu0 0.0
    %25 = vmatpush.msra.mxu0 0.0
    %26 = vmatpush.msra.mxu0 0.0
    %27 = vmatpush.msra.mxu0 0.0
    %28 = vmatpush.msra.mxu0 0.0
    %29 = vmatpush.msra.mxu0 0.0
    %30 = vmatpush.msra.mxu0 0.0
    %31 = vmatpush.msra.mxu0 0.0
    %32 = vmatpush.msra.mxu0 0.0
    %33 = vmatpush.msra.mxu0 0.0
    %34 = vmatpush.msra.mxu0 0.0
    %35 = vmatpush.msra.mxu0 0.0
    %36 = vmatpush.msra.mxu0 0.0
    %v37 = vand.u32 %v20, 4294901760
    %38 = vmatpush.msra.mxu0 %v37
    %v39 = vand.u32 %v16, 4294901760
    %v40 = vsub.f32 %v16, %v39
    %v41 = vand.u32 %v40, 4294901760
    %v42 = vsub.f32 %v40, %v41
    %v43 = vand.u32 %v42, 4294901760
    %44 = vmatmul.f32.gmra.mxu0 %v43
    %v45 = vpop.f32.mrf.mxu0
    %v46 = vadd.f32 0.0, %v45
    %47 = vdwg.mxu0
    %48 = vmatpush.msra.mxu0 0.0
    %49 = vmatpush.msra.mxu0 0.0
    %50 = vmatpush.msra.mxu0 0.0
    %51 = vmatpush.msra.mxu0 0.0
    %52 = vmatpush.msra.mxu0 0.0
    %53 = vmatpush.msra.mxu0 0.0
    %54 = vmatpush.msra.mxu0 0.0
    %55 = vmatpush.msra.mxu0 0.0
    %56 = vmatpush.msra.mxu0 0.0
    %57 = vmatpush.msra.mxu0 0.0
    %58 = vmatpush.msra.mxu0 0.0
    %59 = vmatpush.msra.mxu0 0.0
    %60 = vmatpush.msra.mxu0 0.0
    %61 = vmatpush.msra.mxu0 0.0
    %62 = vmatpush.msra.mxu0 0.0
    %v63 = vand.u32 %v20, 4294901760
    %v64 = vsub.f32 %v20, %v63
    %v65 = vand.u32 %v64, 4294901760
    %v66 = vsub.f32 %v64, %v65
    %v67 = vand.u32 %v66, 4294901760
    %68 = vmatpush.msra.mxu0 %v67
    %v69 = vand.u32 %v16, 4294901760
    %70 = vmatmul.f32.gmra.mxu0 %v69
    %v71 = vpop.f32.mrf.mxu0
    %v72 = vadd.f32 %v46, %v71
    %73 = vdwg.mxu0
    %74 = vmatpush.msra.mxu0 0.0
    %75 = vmatpush.msra.mxu0 0.0
    %76 = vmatpush.msra.mxu0 0.0
    %77 = vmatpush.msra.mxu0 0.0
    %78 = vmatpush.msra.mxu0 0.0
    %79 = vmatpush.msra.mxu0 0.0
    %80 = vmatpush.msra.mxu0 0.0
    %81 = vmatpush.msra.mxu0 0.0
    %82 = vmatpush.msra.mxu0 0.0
    %83 = vmatpush.msra.mxu0 0.0
    %84 = vmatpush.msra.mxu0 0.0
    %85 = vmatpush.msra.mxu0 0.0
    %86 = vmatpush.msra.mxu0 0.0
    %87 = vmatpush.msra.mxu0 0.0
    %88 = vmatpush.msra.mxu0 0.0
    %v89 = vand.u32 %v20, 4294901760
    %v90 = vsub.f32 %v20, %v89
    %91 = vmatpush.msra.mxu0 %v90
    %v92 = vand.u32 %v16, 4294901760
    %v93 = vsub.f32 %v16, %v92
    %94 = vmatmul.f32.gmra.mxu0 %v93
    %v95 = vpop.f32.mrf.mxu0
    %v96 = vadd.f32 %v72, %v95
    %97 = vdwg.mxu0
    %98 = vmatpush.msra.mxu0 0.0
    %99 = vmatpush.msra.mxu0 0.0
    %100 = vmatpush.msra.mxu0 0.0
    %101 = vmatpush.msra.mxu0 0.0
    %102 = vmatpush.msra.mxu0 0.0
    %103 = vmatpush.msra.mxu0 0.0
    %104 = vmatpush.msra.mxu0 0.0
    %105 = vmatpush.msra.mxu0 0.0
    %106 = vmatpush.msra.mxu0 0.0
    %107 = vmatpush.msra.mxu0 0.0
    %108 = vmatpush.msra.mxu0 0.0
    %109 = vmatpush.msra.mxu0 0.0
    %110 = vmatpush.msra.mxu0 0.0
    %111 = vmatpush.msra.mxu0 0.0
    %112 = vmatpush.msra.mxu0 0.0
    %v113 = vand.u32 %v20, 4294901760
    %114 = vmatpush.msra.mxu0 %v113
    %v115 = vand.u32 %v16, 4294901760
    %v116 = vsub.f32 %v16, %v115
    %v117 = vand.u32 %v116, 4294901760
    %118 = vmatmul.f32.gmra.mxu0 %v117
    %v119 = vpop.f32.mrf.mxu0
    %v120 = vadd.f32 %v96, %v119
    %121 = vdwg.mxu0
    %122 = vmatpush.msra.mxu0 0.0
    %123 = vmatpush.msra.mxu0 0.0
    %124 = vmatpush.msra.mxu0 0.0
    %125 = vmatpush.msra.mxu0 0.0
    %126 = vmatpush.msra.mxu0 0.0
    %127 = vmatpush.msra.mxu0 0.0
    %128 = vmatpush.msra.mxu0 0.0
    %129 = vmatpush.msra.mxu0 0.0
    %130 = vmatpush.msra.mxu0 0.0
    %131 = vmatpush.msra.mxu0 0.0
    %132 = vmatpush.msra.mxu0 0.0
    %133 = vmatpush.msra.mxu0 0.0
    %134 = vmatpush.msra.mxu0 0.0
    %135 = vmatpush.msra.mxu0 0.0
    %136 = vmatpush.msra.mxu0 0.0
    %v137 = vand.u32 %v20, 4294901760
    %v138 = vsub.f32 %v20, %v137
    %v139 = vand.u32 %v138, 4294901760
    %140 = vmatpush.msra.mxu0 %v139
    %v141 = vand.u32 %v16, 4294901760
    %142 = vmatmul.f32.gmra.mxu0 %v141
    %v143 = vpop.f32.mrf.mxu0
    %v144 = vadd.f32 %v120, %v143
    %145 = vdwg.mxu0
    %146 = vmatpush.msra.mxu0 0.0
    %147 = vmatpush.msra.mxu0 0.0
    %148 = vmatpush.msra.mxu0 0.0
    %149 = vmatpush.msra.mxu0 0.0
    %150 = vmatpush.msra.mxu0 0.0
    %151 = vmatpush.msra.mxu0 0.0
    %152 = vmatpush.msra.mxu0 0.0
    %153 = vmatpush.msra.mxu0 0.0
    %154 = vmatpush.msra.mxu0 0.0
    %155 = vmatpush.msra.mxu0 0.0
    %156 = vmatpush.msra.mxu0 0.0
    %157 = vmatpush.msra.mxu0 0.0
    %158 = vmatpush.msra.mxu0 0.0
    %159 = vmatpush.msra.mxu0 0.0
    %160 = vmatpush.msra.mxu0 0.0
    %v161 = vand.u32 %v20, 4294901760
    %162 = vmatpush.msra.mxu0 %v161
    %v163 = vand.u32 %v16, 4294901760
    %164 = vmatmul.f32.gmra.mxu0 %v163
    %v165 = vpop.f32.mrf.mxu0
    %v166 = vadd.f32 %v144, %v165
    %167 = vdwg.mxu0
    %v168 = vand.u32 2147483647, %v166
    %vm169 = vcmp.le.f32.partialorder %v168, 0.7853982
    %vm170 = vcmp.lt.s32.totalorder %v166, 0
    %v171 = vand.u32 %v166, 2139095040
    %v172 = vshrl.u32 %v171, 23
    %v173 = vsub.s32 %v172, 127
    %v174 = vand.u32 2147483647, %v166
    %v175 = vand.u32 %v174, 8388607
    %v176 = vor.u32 %v175, 8388608
    %v177 = vsub.s32 0, %v176
    %v178 = vadd.s32 %v173, 1
    %vm179 = vcmp.gt.s32.totalorder %v178, 0
    %v180 = vsel %vm179, %v178, 0
    %v181 = vshrl.u32 %v180, 5
    %v182 = vand.u32 %v180, 31
    %v183 = vsub.s32 32, %v182
    %v184 = vshrl.u32 683565275, %v183
    %v185 = vshll.u32 683565275, %v182
    %v186 = vshrl.u32 2475754826, %v183
    %v187 = vor.u32 %v185, %v186
    %v188 = vshll.u32 2475754826, %v182
    %v189 = vshrl.u32 2131351028, %v183
    %v190 = vor.u32 %v188, %v189
    %v191 = vshll.u32 2131351028, %v182
    %v192 = vshrl.u32 2102212464, %v183
    %v193 = vor.u32 %v191, %v192
    %v194 = vshll.u32 2102212464, %v182
    %v195 = vshrl.u32 920167782, %v183
    %v196 = vor.u32 %v194, %v195
    %v197 = vshll.u32 920167782, %v182
    %v198 = vshrl.u32 1326507024, %v183
    %v199 = vor.u32 %v197, %v198
    %vm200 = vcmp.lt.s32.totalorder %v181, 1
    %vm201 = vcmp.lt.s32.totalorder %v181, 2
    %vm202 = vcmp.lt.s32.totalorder %v181, 3
    %vm203 = vcmp.lt.s32.totalorder %v181, 4
    %v204 = vsel %vm200, %v184, %v187
    %v205 = vsel %vm203, %v193, 2102212464
    %v206 = vsel %vm202, %v190, %v205
    %v207 = vsel %vm201, %v204, %v206
    %v208 = vsel %vm200, %v187, %v190
    %v209 = vsel %vm203, %v196, 920167782
    %v210 = vsel %vm202, %v193, %v209
    %v211 = vsel %vm201, %v208, %v210
    %v212 = vsel %vm200, %v190, %v193
    %v213 = vsel %vm203, %v199, 1326507024
    %v214 = vsel %vm202, %v196, %v213
    %v215 = vsel %vm201, %v212, %v214
    %v216 = vshll.u32 %v176, 8
    %v217 = vand.u32 %v216, 65535
    %v218 = vshrl.u32 %v216, 16
    %v219 = vand.u32 %v215, 65535
    %v220 = vshrl.u32 %v215, 16
    %v221 = vmul.u32 %v217, %v219
    %v222 = vmul.u32 %v217, %v220
    %v223 = vmul.u32 %v218, %v219
    %v224 = vmul.u32 %v218, %v220
    %v225 = vshll.u32 %v222, 16
    %v226 = vshrl.u32 %v222, 16
    %v227 = vshll.u32 %v223, 16
    %v228 = vshrl.u32 %v223, 16
    %vm229 = vc.u32 %v221, %v225
    %v230 = vsel %vm229, 1, 0
    %v231 = vadd.s32 %v221, %v225
    %v232 = vadd.s32 %v224, %v230
    %vm233 = vc.u32 %v231, %v227
    %v234 = vsel %vm233, 1, 0
    %v235 = vadd.s32 %v231, %v227
    %v236 = vadd.s32 %v232, %v234
    %v237 = vadd.s32 %v236, %v226
    %v238 = vadd.s32 %v237, %v228
    %v239 = vand.u32 %v216, 65535
    %v240 = vshrl.u32 %v216, 16
    %v241 = vand.u32 %v211, 65535
    %v242 = vshrl.u32 %v211, 16
    %v243 = vmul.u32 %v239, %v241
    %v244 = vmul.u32 %v239, %v242
    %v245 = vmul.u32 %v240, %v241
    %v246 = vmul.u32 %v240, %v242
    %v247 = vshll.u32 %v244, 16
    %v248 = vshrl.u32 %v244, 16
    %v249 = vshll.u32 %v245, 16
    %v250 = vshrl.u32 %v245, 16
    %vm251 = vc.u32 %v243, %v247
    %v252 = vsel %vm251, 1, 0
    %v253 = vadd.s32 %v243, %v247
    %v254 = vadd.s32 %v246, %v252
    %vm255 = vc.u32 %v253, %v249
    %v256 = vsel %vm255, 1, 0
    %v257 = vadd.s32 %v253, %v249
    %v258 = vadd.s32 %v254, %v256
    %v259 = vadd.s32 %v258, %v248
    %v260 = vadd.s32 %v259, %v250
    %v261 = vmul.u32 %v216, %v207
    %v262 = vadd.s32 %v238, %v257
    %vm263 = vc.u32 %v238, %v257
    %v264 = vadd.s32 %v260, 1
    %v265 = vsel %vm263, %v264, %v260
    %v266 = vadd.s32 %v261, %v265
    %v267 = vadd.s32 %v266, 536870912
    %v268 = vshrl.u32 %v267, 30
    %v269 = vshll.u32 %v268, 30
    %v270 = vsub.s32 %v266, %v269
    %vm271 = vcmp.lt.s32.totalorder %v270, 0
    %v272 = vsub.s32 0, %v270
    %v273 = vsel %vm271, %v272, %v270
    %v274 = vclz %v273
    %v275 = vsub.s32 %v274, 2
    %vm276 = vcmp.gt.s32.totalorder 0, %v275
    %v277 = vsel %vm276, 0, %v275
    %v278 = vsub.s32 32, %v277
    %v279 = vshll.u32 %v270, %v277
    %v280 = vshrl.u32 %v262, %v278
    %v281 = vor.u32 %v279, %v280
    %v282 = vsub.s32 4294967266, %v277
    %v283 = vadd.s32 %v282, 127
    %v284 = vshll.u32 %v283, 23
    %v285 = vor.u32 4788187, %v284
    %v286 = vand.u32 2147483647, %v285
    %v288 = vcvt.s32.f32 %v281
    %v289 = vmul.f32 %v288, %v286
    %v290 = vxor.u32 %v289, 2147483648
    %v291 = vsel %vm170, %v290, %v289
    %v292 = vsub.s32 4, %v268
    %v293 = vsel %vm170, %v292, %v268
    %v294 = vsel %vm169, %v166, %v291
    %v295 = vsel %vm169, 0, %v293
    %v296 = vmul.f32 %v294, %v294
    %v297 = vmul.f32 %v296, -0.001358992
    %v298 = vadd.f32 %v297, 0.041655596
    %v299 = vmul.f32 %v296, %v298
    %v300 = vadd.f32 %v299, -0.4999988
    %v301 = vmul.f32 %v296, %v300
    %v302 = vadd.f32 1.0, %v301
    %v303 = vmul.f32 %v294, %v294
    %v304 = vmul.f32 %v303, -0.00019511016
    %v305 = vadd.f32 %v304, 0.008332121
    %v306 = vmul.f32 %v303, %v305
    %v307 = vadd.f32 %v306, -0.16666654
    %v308 = vmul.f32 %v303, %v307
    %v309 = vadd.f32 %v308, 1.0
    %v310 = vmul.f32 %v309, %v294
    %vm311 = vweird.f32 %v166
    %v312 = vand.u32 %v295, 3
    %vm313 = vcmp.lt.s32.totalorder %v312, 2
    %vm314 = vcmp.eq.s32.totalorder %v312, 0
    %v315 = vxor.u32 %v310, 2147483648
    %v316 = vsel %vm314, %v302, %v315
    %vm317 = vcmp.eq.s32.totalorder %v312, 2
    %v318 = vxor.u32 %v302, 2147483648
    %v319 = vsel %vm317, %v318, %v310
    %v320 = vsel %vm313, %v316, %v319
    %v321 = vsel %vm311, nan, %v320
    %322 = vst [vmem:[#allocation2] sm:$0xff] %v321
    %v323 = vand.u32 2147483647, %v166
    %vm324 = vcmp.le.f32.partialorder %v323, 0.7853982
    %vm325 = vcmp.lt.s32.totalorder %v166, 0
    %v326 = vand.u32 %v166, 2139095040
    %v327 = vshrl.u32 %v326, 23
    %v328 = vsub.s32 %v327, 127
    %v329 = vand.u32 2147483647, %v166
    %v330 = vand.u32 %v329, 8388607
    %v331 = vor.u32 %v330, 8388608
    %v332 = vsub.s32 0, %v331
    %v333 = vadd.s32 %v328, 1
    %vm334 = vcmp.gt.s32.totalorder %v333, 0
    %v335 = vsel %vm334, %v333, 0
    %v336 = vshrl.u32 %v335, 5
    %v337 = vand.u32 %v335, 31
    %v338 = vsub.s32 32, %v337
    %v339 = vshrl.u32 683565275, %v338
    %v340 = vshll.u32 683565275, %v337
    %v341 = vshrl.u32 2475754826, %v338
    %v342 = vor.u32 %v340, %v341
    %v343 = vshll.u32 2475754826, %v337
    %v344 = vshrl.u32 2131351028, %v338
    %v345 = vor.u32 %v343, %v344
    %v346 = vshll.u32 2131351028, %v337
    %v347 = vshrl.u32 2102212464, %v338
    %v348 = vor.u32 %v346, %v347
    %v349 = vshll.u32 2102212464, %v337
    %v350 = vshrl.u32 920167782, %v338
    %v351 = vor.u32 %v349, %v350
    %v352 = vshll.u32 920167782, %v337
    %v353 = vshrl.u32 1326507024, %v338
    %v354 = vor.u32 %v352, %v353
    %vm355 = vcmp.lt.s32.totalorder %v336, 1
    %vm356 = vcmp.lt.s32.totalorder %v336, 2
    %vm357 = vcmp.lt.s32.totalorder %v336, 3
    %vm358 = vcmp.lt.s32.totalorder %v336, 4
    %v359 = vsel %vm355, %v339, %v342
    %v360 = vsel %vm358, %v348, 2102212464
    %v361 = vsel %vm357, %v345, %v360
    %v362 = vsel %vm356, %v359, %v361
    %v363 = vsel %vm355, %v342, %v345
    %v364 = vsel %vm358, %v351, 920167782
    %v365 = vsel %vm357, %v348, %v364
    %v366 = vsel %vm356, %v363, %v365
    %v367 = vsel %vm355, %v345, %v348
    %v368 = vsel %vm358, %v354, 1326507024
    %v369 = vsel %vm357, %v351, %v368
    %v370 = vsel %vm356, %v367, %v369
    %v371 = vshll.u32 %v331, 8
    %v372 = vand.u32 %v371, 65535
    %v373 = vshrl.u32 %v371, 16
    %v374 = vand.u32 %v370, 65535
    %v375 = vshrl.u32 %v370, 16
    %v376 = vmul.u32 %v372, %v374
    %v377 = vmul.u32 %v372, %v375
    %v378 = vmul.u32 %v373, %v374
    %v379 = vmul.u32 %v373, %v375
    %v380 = vshll.u32 %v377, 16
    %v381 = vshrl.u32 %v377, 16
    %v382 = vshll.u32 %v378, 16
    %v383 = vshrl.u32 %v378, 16
    %vm384 = vc.u32 %v376, %v380
    %v385 = vsel %vm384, 1, 0
    %v386 = vadd.s32 %v376, %v380
    %v387 = vadd.s32 %v379, %v385
    %vm388 = vc.u32 %v386, %v382
    %v389 = vsel %vm388, 1, 0
    %v390 = vadd.s32 %v386, %v382
    %v391 = vadd.s32 %v387, %v389
    %v392 = vadd.s32 %v391, %v381
    %v393 = vadd.s32 %v392, %v383
    %v394 = vand.u32 %v371, 65535
    %v395 = vshrl.u32 %v371, 16
    %v396 = vand.u32 %v366, 65535
    %v397 = vshrl.u32 %v366, 16
    %v398 = vmul.u32 %v394, %v396
    %v399 = vmul.u32 %v394, %v397
    %v400 = vmul.u32 %v395, %v396
    %v401 = vmul.u32 %v395, %v397
    %v402 = vshll.u32 %v399, 16
    %v403 = vshrl.u32 %v399, 16
    %v404 = vshll.u32 %v400, 16
    %v405 = vshrl.u32 %v400, 16
    %vm406 = vc.u32 %v398, %v402
    %v407 = vsel %vm406, 1, 0
    %v408 = vadd.s32 %v398, %v402
    %v409 = vadd.s32 %v401, %v407
    %vm410 = vc.u32 %v408, %v404
    %v411 = vsel %vm410, 1, 0
    %v412 = vadd.s32 %v408, %v404
    %v413 = vadd.s32 %v409, %v411
    %v414 = vadd.s32 %v413, %v403
    %v415 = vadd.s32 %v414, %v405
    %v416 = vmul.u32 %v371, %v362
    %v417 = vadd.s32 %v393, %v412
    %vm418 = vc.u32 %v393, %v412
    %v419 = vadd.s32 %v415, 1
    %v420 = vsel %vm418, %v419, %v415
    %v421 = vadd.s32 %v416, %v420
    %v422 = vadd.s32 %v421, 536870912
    %v423 = vshrl.u32 %v422, 30
    %v424 = vshll.u32 %v423, 30
    %v425 = vsub.s32 %v421, %v424
    %vm426 = vcmp.lt.s32.totalorder %v425, 0
    %v427 = vsub.s32 0, %v425
    %v428 = vsel %vm426, %v427, %v425
    %v429 = vclz %v428
    %v430 = vsub.s32 %v429, 2
    %vm431 = vcmp.gt.s32.totalorder 0, %v430
    %v432 = vsel %vm431, 0, %v430
    %v433 = vsub.s32 32, %v432
    %v434 = vshll.u32 %v425, %v432
    %v435 = vshrl.u32 %v417, %v433
    %v436 = vor.u32 %v434, %v435
    %v437 = vsub.s32 4294967266, %v432
    %v438 = vadd.s32 %v437, 127
    %v439 = vshll.u32 %v438, 23
    %v440 = vor.u32 4788187, %v439
    %v441 = vand.u32 2147483647, %v440
    %v443 = vcvt.s32.f32 %v436
    %v444 = vmul.f32 %v443, %v441
    %v445 = vxor.u32 %v444, 2147483648
    %v446 = vsel %vm325, %v445, %v444
    %v447 = vsub.s32 4, %v423
    %v448 = vsel %vm325, %v447, %v423
    %v449 = vsel %vm324, %v166, %v446
    %v450 = vsel %vm324, 0, %v448
    %v451 = vmul.f32 %v449, %v449
    %v452 = vmul.f32 %v451, -0.001358992
    %v453 = vadd.f32 %v452, 0.041655596
    %v454 = vmul.f32 %v451, %v453
    %v455 = vadd.f32 %v454, -0.4999988
    %v456 = vmul.f32 %v451, %v455
    %v457 = vadd.f32 1.0, %v456
    %v458 = vmul.f32 %v449, %v449
    %v459 = vmul.f32 %v458, -0.00019511016
    %v460 = vadd.f32 %v459, 0.008332121
    %v461 = vmul.f32 %v458, %v460
    %v462 = vadd.f32 %v461, -0.16666654
    %v463 = vmul.f32 %v458, %v462
    %v464 = vadd.f32 %v463, 1.0
    %v465 = vmul.f32 %v464, %v449
    %vm466 = vweird.f32 %v166
    %v467 = vadd.s32 %v450, 3
    %v468 = vand.u32 %v467, 3
    %vm469 = vcmp.lt.s32.totalorder %v468, 2
    %vm470 = vcmp.eq.s32.totalorder %v468, 0
    %v471 = vxor.u32 %v465, 2147483648
    %v472 = vsel %vm470, %v457, %v471
    %vm473 = vcmp.eq.s32.totalorder %v468, 2
    %v474 = vxor.u32 %v457, 2147483648
    %v475 = vsel %vm473, %v474, %v465
    %v476 = vsel %vm469, %v472, %v475
    %v477 = vsel %vm466, nan, %v476
    %478 = vst [vmem:[#allocation2 + $0x8] sm:$0xff] %v477
    // Predicated region
    $region10: #{tpu_custom_call.1} parent=1 // pred_check
      _
    $region11: #{tpu_custom_call.1} parent=1 // pred_check_branch
      %480 = sbr.rel (0) target = $region13
    $region12: #{tpu_custom_call.1} parent=1 // pred_region
      %482 = vsyncadd [#allocation3], 0
      %s484 = sshll.u32 [#allocation2], 4
      %s485 = int_to_ptr.vmem [resolvable:$true] %s484
      %s486 = sshll.u32 %s2, 4
      %s487 = int_to_ptr.hbm [resolvable:$true] %s486
      %489 = dma.vmem_to_hbm [thread:$0]  %s485, 256, %s487, [#allocation3]
    $region13: #{tpu_custom_call.1} parent=1 // pred_fallthru
      _
    // Predicated region
    $region14: #{tpu_custom_call.1} parent=1 // pred_check
      _
    $region15: #{tpu_custom_call.1} parent=1 // pred_check_branch
      %491 = sbr.rel (0) target = $region17
    $region16: #{tpu_custom_call.1} parent=1 // pred_region
      %493 = dma.done [#allocation3], 256
    $region17: #{tpu_custom_call.1} parent=1 // pred_fallthru
      _
    %494 = vsyncpa [#allocation3], 1

</llo_original>
